<compile_context>
chip_gen: v5e
topology: v5e:2x2
jax: 0.10.0
libtpu: 0.0.40
codegen_flags: <defaults>
</compile_context>

<pallas_src>
import functools
import math

import jax
import jax.numpy as jnp
from jax.experimental import pallas as pl
from jax.experimental.pallas import tpu as pltpu

_LANE = 128      # lane width of a vreg (last-dim tiling unit)
_SUBLANE = 8     # sublane count (second-to-last-dim tiling unit, f32)
_MAX_BLOCK_BATCH = 4096


def _round_up(n, m):
    return ((n + m - 1) // m) * m


def _mlp_categorical_kernel(x_ref, w1_ref, b1_ref, w2_ref, b2_ref, logits_ref):
    # In-kernel cast of the activation tile (hidden under the DMA pipeline).
    x = x_ref[...].astype(w1_ref.dtype)

    # Linear 1 (MXU, f32 accumulation) + bias + ELU(alpha=1).
    h = jnp.dot(x, w1_ref[...], preferred_element_type=jnp.float32)
    h = h + b1_ref[...]
    # Clamp the exp argument so the untaken (positive) branch can't overflow.
    h = jnp.where(h > 0, h, jnp.exp(jnp.minimum(h, 0.0)) - 1.0)

    # Linear 2 -> raw logits over the lane-padded output columns.  Padded
    # columns have a -1e30 bias, so they contribute nothing to the logsumexp.
    raw = jnp.dot(h.astype(w2_ref.dtype), w2_ref[...],
                  preferred_element_type=jnp.float32) + b2_ref[...]

    # Normalized logits: logits - logsumexp(logits), i.e. what
    # torch.distributions.OneHotCategorical(logits=...) stores.
    m = jnp.max(raw, axis=-1, keepdims=True)           # (block, 1)
    s = jnp.sum(jnp.exp(raw - m), axis=-1, keepdims=True)
    lse = m + jnp.log(s)                                # (block, 1)

    # Store only the real out_dim columns (narrow output -> 16x fewer HBM bytes).
    n_out = logits_ref.shape[-1]
    logits_ref[...] = raw[:, :n_out] - lse


@functools.partial(jax.jit, static_argnames=("out_dim", "block_batch"))
def categorical_network_forward(x, w1, b1, w2, b2, *, out_dim, block_batch=None):
    """Returns (normalized_logits, probs) of the OneHotCategorical distribution.

    w1/b1/w2/b2 are the lane-padded parameters produced by
    CategoricalNetworkPallas; `out_dim` is the true (unpadded) output width.
    """
    batch, in_dim = x.shape

    if block_batch is None:
        # >= 2 grid steps whenever batch allows it (megacore / 2-TC sharding),
        # capped so the double-buffered working set stays well under VMEM.
        block_batch = min(_MAX_BLOCK_BATCH,
                          max(_SUBLANE, _round_up(pl.cdiv(batch, 2), _SUBLANE)))
    block_batch = max(_SUBLANE, _round_up(block_batch, _SUBLANE))

    grid = (pl.cdiv(batch, block_batch),)   # ragged last block handled by Pallas

    logits = pl.pallas_call(
        _mlp_categorical_kernel,
        out_shape=jax.ShapeDtypeStruct((batch, out_dim), jnp.float32),
        grid=grid,
        in_specs=[
            # Batch-tiled activation tile (pipelined / double-buffered).
            pl.BlockSpec((block_batch, in_dim), lambda i: (i, 0)),
            # Grid-invariant weights & biases: full blocks, fetched once,
            # resident in VMEM across all batch tiles.
            pl.BlockSpec(w1.shape, lambda i: (0, 0)),
            pl.BlockSpec(b1.shape, lambda i: (0, 0)),
            pl.BlockSpec(w2.shape, lambda i: (0, 0)),
            pl.BlockSpec(b2.shape, lambda i: (0, 0)),
        ],
        # Narrow output block (last dim == full array dim == out_dim): masked
        # stores in VMEM, but 16x fewer HBM writeback bytes than the padded slab.
        out_specs=pl.BlockSpec((block_batch, out_dim), lambda i: (i, 0)),
        compiler_params=pltpu.CompilerParams(
            dimension_semantics=("parallel",),
            vmem_limit_bytes=32 * 1024 * 1024,
        ),
    )(x, w1, b1, w2, b2)

    probs = jnp.exp(logits)   # exp(normalized logits) == softmax(raw logits)
    return logits, probs


class CategoricalNetworkPallas:
    """JAX/Pallas port of stannetflow CategoricalNetwork.

    forward(x) returns a dict with the OneHotCategorical parameters
    (normalized logits and probs), since a torch Distribution object has no
    direct JAX equivalent here.
    """

    def __init__(self, in_dim, out_dim, hidden_dim=None, key=None,
                 param_dtype=jnp.float32):
        if hidden_dim is None:
            hidden_dim = in_dim
        if key is None:
            key = jax.random.PRNGKey(0)
        k1, k2, k3, k4 = jax.random.split(key, 4)

        self.in_dim = in_dim
        self.out_dim = out_dim
        self.hidden_dim = hidden_dim

        hidden_pad = _round_up(hidden_dim, _LANE)
        out_pad = _round_up(out_dim, _LANE)

        # Deterministic init mimicking torch.nn.Linear: U(-1/sqrt(fan_in), ...).
        bound1 = 1.0 / math.sqrt(in_dim)
        bound2 = 1.0 / math.sqrt(hidden_dim)
        # Stored transposed relative to torch: (in_features, out_features).
        w1 = jax.random.uniform(k1, (in_dim, hidden_dim), jnp.float32, -bound1, bound1)
        b1 = jax.random.uniform(k2, (1, hidden_dim), jnp.float32, -bound1, bound1)
        w2 = jax.random.uniform(k3, (hidden_dim, out_dim), jnp.float32, -bound2, bound2)
        b2 = jax.random.uniform(k4, (1, out_dim), jnp.float32, -bound2, bound2)

        # Unpadded copies (reference / export).
        self.w1_raw, self.b1_raw, self.w2_raw, self.b2_raw = w1, b1, w2, b2

        # Lane-padded parameters used by the kernel.  Matmul operands (w1, w2)
        # take param_dtype (bf16 recommended on v5e/v6e/v7x in production to
        # halve weight residency and x DMA; elementwise math stays f32).
        # Biases are added in f32 after the MXU and stay f32.
        self.w1 = jnp.pad(w1, ((0, 0), (0, hidden_pad - hidden_dim))).astype(param_dtype)
        self.b1 = jnp.pad(b1, ((0, 0), (0, hidden_pad - hidden_dim))).astype(jnp.float32)
        self.w2 = jnp.pad(w2, ((0, hidden_pad - hidden_dim),
                               (0, out_pad - out_dim))).astype(param_dtype)
        self.b2 = jnp.full((1, out_pad), -1e30, jnp.float32).at[:, :out_dim].set(b2)

    def forward(self, x, block_batch=None):
        logits, probs = categorical_network_forward(
            x, self.w1, self.b1, self.w2, self.b2,
            out_dim=self.out_dim, block_batch=block_batch)
        # TODO(synk): OneHotCategorical sampling (Gumbel-argmax one-hot draw) is
        # left to the caller; the kernel returns the distribution parameters.
        return {"logits": logits, "probs": probs}


def _reference_forward(x, w1, b1, w2, b2):
    h = x @ w1 + b1
    h = jnp.where(h > 0, h, jnp.exp(jnp.minimum(h, 0.0)) - 1.0)
    raw = h @ w2 + b2
    norm = raw - jax.scipy.special.logsumexp(raw, axis=-1, keepdims=True)
    return norm, jax.nn.softmax(raw, axis=-1)


if __name__ == "__main__":
    key = jax.random.PRNGKey(0)
    k_param, k_x, k_x2 = jax.random.split(key, 3)

    batch, in_dim, hidden_dim, out_dim = 8, 16, 32, 8
    net = CategoricalNetworkPallas(in_dim, out_dim, hidden_dim, key=k_param)

    # Small single-tile case.
    x = jax.random.normal(k_x, (batch, in_dim), dtype=jnp.float32)
    out = net.forward(x)
    logits = jax.block_until_ready(out["logits"])
    probs = jax.block_until_ready(out["probs"])

    ref_logits, ref_probs = _reference_forward(
        x, net.w1_raw, net.b1_raw, net.w2_raw, net.b2_raw)

    assert logits.shape == (batch, out_dim)
    assert probs.shape == (batch, out_dim)
    assert jnp.allclose(logits, ref_logits, atol=1e-4, rtol=1e-4)
    assert jnp.allclose(probs, ref_probs, atol=1e-5, rtol=1e-4)
    assert jnp.allclose(jnp.sum(probs, axis=-1), 1.0, atol=1e-5)

    # Multi-step grid with a ragged last block (exercises masked writes /
    # megacore split path).
    batch2 = 200
    x2 = jax.random.normal(k_x2, (batch2, in_dim), dtype=jnp.float32)
    out2 = net.forward(x2)
    logits2 = jax.block_until_ready(out2["logits"])
    probs2 = jax.block_until_ready(out2["probs"])
    ref_logits2, ref_probs2 = _reference_forward(
        x2, net.w1_raw, net.b1_raw, net.w2_raw, net.b2_raw)
    assert logits2.shape == (batch2, out_dim)
    assert jnp.allclose(logits2, ref_logits2, atol=1e-4, rtol=1e-4)
    assert jnp.allclose(probs2, ref_probs2, atol=1e-5, rtol=1e-4)
    assert jnp.allclose(jnp.sum(probs2, axis=-1), 1.0, atol=1e-5)

    print("KERNEL_OK")
</pallas_src>

<mosaic_0001>
module attributes {stable_mosaic.version = 11 : i64} {
  func.func @_mlp_categorical_kernel(%arg0: i32, %arg1: memref<8x16xf32, #tpu.memory_space<vmem>>, %arg2: memref<16x128xf32, #tpu.memory_space<vmem>>, %arg3: memref<1x128xf32, #tpu.memory_space<vmem>>, %arg4: memref<128x128xf32, #tpu.memory_space<vmem>>, %arg5: memref<1x128xf32, #tpu.memory_space<vmem>>, %arg6: memref<8x8xf32, #tpu.memory_space<vmem>>) attributes {dimension_semantics = [#tpu.dimension_semantics<parallel>], iteration_bounds = array<i64: 1>, scalar_prefetch = 0 : i64, scratch_operands = 0 : i64, tpu.core_type = #tpu.core_type<tc>, window_params = [{transform_indices = @transform_0, window_bounds = array<i64: 8, 16>}, {pipeline_mode = #tpu.pipeline_mode<synchronous>, transform_indices = @transform_1, window_bounds = array<i64: 16, 128>}, {pipeline_mode = #tpu.pipeline_mode<synchronous>, transform_indices = @transform_2, window_bounds = array<i64: 1, 128>}, {pipeline_mode = #tpu.pipeline_mode<synchronous>, transform_indices = @transform_3, window_bounds = array<i64: 128, 128>}, {pipeline_mode = #tpu.pipeline_mode<synchronous>, transform_indices = @transform_4, window_bounds = array<i64: 1, 128>}, {transform_indices = @transform_5, window_bounds = array<i64: 8, 8>}]} {
    %c0 = arith.constant 0 : index
    %c0_0 = arith.constant 0 : index
    %0 = vector.load %arg1[%c0, %c0_0] : memref<8x16xf32, #tpu.memory_space<vmem>>, vector<8x16xf32>
    %c0_1 = arith.constant 0 : index
    %c0_2 = arith.constant 0 : index
    %1 = vector.load %arg2[%c0_1, %c0_2] : memref<16x128xf32, #tpu.memory_space<vmem>>, vector<16x128xf32>
    %cst = arith.constant dense<0.000000e+00> : vector<8x128xf32>
    %2 = tpu.matmul %0, %1, %cst {dimension_numbers = #tpu.dot_dimension_numbers<[1], [0], [0], [1], [0, 0, 1, 1], [], []>} : vector<8x16xf32>, vector<16x128xf32>, vector<8x128xf32> -> vector<8x128xf32>
    %c0_3 = arith.constant 0 : index
    %c0_4 = arith.constant 0 : index
    %3 = vector.load %arg3[%c0_3, %c0_4] : memref<1x128xf32, #tpu.memory_space<vmem>>, vector<1x128xf32>
    %4 = vector.broadcast %3 : vector<1x128xf32> to vector<8x128xf32>
    %5 = arith.addf %2, %4 : vector<8x128xf32>
    %cst_5 = arith.constant 0.000000e+00 : f32
    %6 = vector.broadcast %cst_5 : f32 to vector<8x128xf32>
    %7 = arith.cmpf ogt, %5, %6 : vector<8x128xf32>
    %cst_6 = arith.constant 0.000000e+00 : f32
    %8 = vector.broadcast %cst_6 : f32 to vector<8x128xf32>
    %9 = arith.minimumf %5, %8 : vector<8x128xf32>
    %10 = math.exp %9 : vector<8x128xf32>
    %cst_7 = arith.constant 1.000000e+00 : f32
    %11 = vector.broadcast %cst_7 : f32 to vector<8x128xf32>
    %12 = arith.subf %10, %11 : vector<8x128xf32>
    %13 = arith.select %7, %5, %12 : vector<8x128xi1>, vector<8x128xf32>
    %c0_8 = arith.constant 0 : index
    %c0_9 = arith.constant 0 : index
    %14 = vector.load %arg4[%c0_8, %c0_9] : memref<128x128xf32, #tpu.memory_space<vmem>>, vector<128x128xf32>
    %cst_10 = arith.constant dense<0.000000e+00> : vector<8x128xf32>
    %15 = tpu.matmul %13, %14, %cst_10 {dimension_numbers = #tpu.dot_dimension_numbers<[1], [0], [0], [1], [0, 0, 1, 1], [], []>} : vector<8x128xf32>, vector<128x128xf32>, vector<8x128xf32> -> vector<8x128xf32>
    %c0_11 = arith.constant 0 : index
    %c0_12 = arith.constant 0 : index
    %16 = vector.load %arg5[%c0_11, %c0_12] : memref<1x128xf32, #tpu.memory_space<vmem>>, vector<1x128xf32>
    %17 = vector.broadcast %16 : vector<1x128xf32> to vector<8x128xf32>
    %18 = arith.addf %15, %17 : vector<8x128xf32>
    %cst_13 = arith.constant dense<0xFF800000> : vector<8xf32>
    %19 = vector.multi_reduction <maximumf>, %18, %cst_13 [1] : vector<8x128xf32> to vector<8xf32>
    %20 = vector.shape_cast %19 : vector<8xf32> to vector<8x1xf32>
    %21 = vector.broadcast %20 : vector<8x1xf32> to vector<8x128xf32>
    %22 = arith.subf %18, %21 : vector<8x128xf32>
    %23 = math.exp %22 : vector<8x128xf32>
    %cst_14 = arith.constant dense<0.000000e+00> : vector<8xf32>
    %24 = vector.multi_reduction <add>, %23, %cst_14 [1] : vector<8x128xf32> to vector<8xf32>
    %25 = vector.shape_cast %24 : vector<8xf32> to vector<8x1xf32>
    %26 = math.log %25 : vector<8x1xf32>
    %27 = arith.addf %20, %26 : vector<8x1xf32>
    %28 = vector.extract_strided_slice %18 {offsets = [0, 0], sizes = [8, 8], strides = [1, 1]} : vector<8x128xf32> to vector<8x8xf32>
    %29 = vector.broadcast %27 : vector<8x1xf32> to vector<8x8xf32>
    %30 = arith.subf %28, %29 : vector<8x8xf32>
    %c0_15 = arith.constant 0 : index
    %c0_16 = arith.constant 0 : index
    %31 = vector.load %arg6[%c0_15, %c0_16] : memref<8x8xf32, #tpu.memory_space<vmem>>, vector<8x8xf32>
    tpu.vector_store %arg6[%c0_15, %c0_16], %30 {strides = array<i32>} : memref<8x8xf32, #tpu.memory_space<vmem>>, vector<8x8xf32>,
    return
  }
  func.func @transform_0(%arg0: i32) -> (i32, i32) {
    %c0_i32 = arith.constant 0 : i32
    %c0_i32_0 = arith.constant 0 : i32
    return %arg0, %c0_i32 : i32, i32
  }
  func.func @transform_1(%arg0: i32) -> (i32, i32) {
    %c0_i32 = arith.constant 0 : i32
    %c0_i32_0 = arith.constant 0 : i32
    %c0_i32_1 = arith.constant 0 : i32
    return %c0_i32, %c0_i32_0 : i32, i32
  }
  func.func @transform_2(%arg0: i32) -> (i32, i32) {
    %c0_i32 = arith.constant 0 : i32
    %c0_i32_0 = arith.constant 0 : i32
    %c0_i32_1 = arith.constant 0 : i32
    return %c0_i32, %c0_i32_0 : i32, i32
  }
  func.func @transform_3(%arg0: i32) -> (i32, i32) {
    %c0_i32 = arith.constant 0 : i32
    %c0_i32_0 = arith.constant 0 : i32
    %c0_i32_1 = arith.constant 0 : i32
    return %c0_i32, %c0_i32_0 : i32, i32
  }
  func.func @transform_4(%arg0: i32) -> (i32, i32) {
    %c0_i32 = arith.constant 0 : i32
    %c0_i32_0 = arith.constant 0 : i32
    %c0_i32_1 = arith.constant 0 : i32
    return %c0_i32, %c0_i32_0 : i32, i32
  }
  func.func @transform_5(%arg0: i32) -> (i32, i32) {
    %c0_i32 = arith.constant 0 : i32
    %c0_i32_0 = arith.constant 0 : i32
    return %arg0, %c0_i32 : i32, i32
  }
}

</mosaic_0001>

<llo_original>
// kernel: categorical_network_forward.1
$region0: #{categorical_network_forward.1}
  #allocation0 [shape = 'u32[]', space=smem, size = 0x4, offset = 0x4, fixed_abs, tag = 'smem constant byte address 0x4 - core index']
  #allocation1 [shape = 'u32[72,128]{1,0:T(1,128)}', space=vmem, size = 0x9000, scoped, tag = 'internal scratch']
  %s0 = inlined_call_operand.hbm [shape: f32[8,16], index: 0, kind: input, shape index: {}]
  %s1 = inlined_call_operand.hbm [shape: f32[16,128], index: 1, kind: input, shape index: {}]
  %s2 = inlined_call_operand.vmem [shape: f32[1,128], index: 2, kind: input, shape index: {}]
  %s3 = inlined_call_operand.hbm [shape: f32[128,128], index: 3, kind: input, shape index: {}]
  %s4 = inlined_call_operand.vmem [shape: f32[1,128], index: 4, kind: input, shape index: {}]
  %s5 = inlined_call_operand.vmem [shape: f32[8,8], index: 5, kind: output, shape index: {}]
  %s6 = sld [smem:[#allocation0]]
  $region42: #{categorical_network_forward.1} parent=0
    _
  %s8 = ssub.s32 1, %s6
  %s9 = scalar_select 0, %s8, %s6
  $region1: #{categorical_network_forward.1} parent=0
    #allocation2 [shape = 'u8[4096]{0}', space=vmem, size = 0x1000, scoped, tag = 'input window, operand 0, single buffered']
    #allocation3 [shape = 's32[1]{0}', space=sflag, size = 0x4, scoped, tag = 'scoped memory for categorical_network_forward.1']
    #allocation4 [shape = 'u8[8192]{0}', space=vmem, size = 0x2000, scoped, tag = 'input window, operand 1, single buffered']
    #allocation5 [shape = 's32[1]{0}', space=sflag, size = 0x4, scoped, tag = 'scoped memory for categorical_network_forward.1']
    #allocation6 [shape = 'u8[65536]{0}', space=vmem, size = 0x10000, scoped, tag = 'input window, operand 3, single buffered']
    %10 = vsyncpa [#allocation3], 0
    %11 = vsyncpa [#allocation5], 0
    // Predicated region
    $region2: #{categorical_network_forward.1} parent=1 // pred_check
      _
    $region3: #{categorical_network_forward.1} parent=1 // pred_check_branch
      %13 = sbr.rel (0) target = $region5
    $region4: #{categorical_network_forward.1} parent=1 // pred_region
      %15 = vsyncadd [#allocation3], 0
      %s17 = sshll.u32 %s0, 4
      %s18 = int_to_ptr.hbm [resolvable:$true] %s17
      %s19 = sshll.u32 [#allocation2], 4
      %s20 = int_to_ptr.vmem [resolvable:$true] %s19
      %22 = dma.hbm_to_vmem [thread:$0]  %s18, 128, %s20, [#allocation3]
    $region5: #{categorical_network_forward.1} parent=1 // pred_fallthru
      _
    // Predicated region
    $region6: #{categorical_network_forward.1} parent=1 // pred_check
      _
    $region7: #{categorical_network_forward.1} parent=1 // pred_check_branch
      %24 = sbr.rel (0) target = $region9
    $region8: #{categorical_network_forward.1} parent=1 // pred_region
      %26 = vsyncadd [#allocation5], 0
      %s27 = sshll.u32 %s1, 4
      %s28 = int_to_ptr.hbm [resolvable:$true] %s27
      %s29 = sshll.u32 [#allocation4], 4
      %s30 = int_to_ptr.vmem [resolvable:$true] %s29
      %35 = dma.hbm_to_vmem [thread:$0]  %s28, 256, %s30, [#allocation5], 128, 128, 8
    $region9: #{categorical_network_forward.1} parent=1 // pred_fallthru
      _
    // Predicated region
    $region10: #{categorical_network_forward.1} parent=1 // pred_check
      _
    $region11: #{categorical_network_forward.1} parent=1 // pred_check_branch
      %37 = sbr.rel (0) target = $region13
    $region12: #{categorical_network_forward.1} parent=1 // pred_region
      _
    $region13: #{categorical_network_forward.1} parent=1 // pred_fallthru
      _
    // Predicated region
    $region14: #{categorical_network_forward.1} parent=1 // pred_check
      _
    $region15: #{categorical_network_forward.1} parent=1 // pred_check_branch
      %39 = sbr.rel (0) target = $region17
    $region16: #{categorical_network_forward.1} parent=1 // pred_region
      %41 = vsyncadd [#allocation5], 0
      %s42 = sshll.u32 %s3, 4
      %s43 = int_to_ptr.hbm [resolvable:$true] %s42
      %s44 = sshll.u32 [#allocation6], 4
      %s45 = int_to_ptr.vmem [resolvable:$true] %s44
      %50 = dma.hbm_to_vmem [thread:$0]  %s43, 2048, %s45, [#allocation5], 128, 128, 8
    $region17: #{categorical_network_forward.1} parent=1 // pred_fallthru
      _
    // Predicated region
    $region18: #{categorical_network_forward.1} parent=1 // pred_check
      _
    $region19: #{categorical_network_forward.1} parent=1 // pred_check_branch
      %52 = sbr.rel (0) target = $region21
    $region20: #{categorical_network_forward.1} parent=1 // pred_region
      _
    $region21: #{categorical_network_forward.1} parent=1 // pred_fallthru
      _
    // Predicated region
    $region22: #{categorical_network_forward.1} parent=1 // pred_check
      _
    $region23: #{categorical_network_forward.1} parent=1 // pred_check_branch
      %54 = sbr.rel (0) target = $region25
    $region24: #{categorical_network_forward.1} parent=1 // pred_region
      %56 = dma.done [#allocation3], 128
    $region25: #{categorical_network_forward.1} parent=1 // pred_fallthru
      _
    // Predicated region
    $region26: #{categorical_network_forward.1} parent=1 // pred_check
      _
    $region27: #{categorical_network_forward.1} parent=1 // pred_check_branch
      %58 = sbr.rel (0) target = $region29
    $region28: #{categorical_network_forward.1} parent=1 // pred_region
      %60 = dma.done [#allocation5], 256
    $region29: #{categorical_network_forward.1} parent=1 // pred_fallthru
      _
    // Predicated region
    $region30: #{categorical_network_forward.1} parent=1 // pred_check
      _
    $region31: #{categorical_network_forward.1} parent=1 // pred_check_branch
      %62 = sbr.rel (0) target = $region33
    $region32: #{categorical_network_forward.1} parent=1 // pred_region
      %64 = dma.done [#allocation5], 2048
    $region33: #{categorical_network_forward.1} parent=1 // pred_fallthru
      _
    %v65 = vld [vmem:[#allocation2] sm:$0xff]
    %v66 = vld [vmem:[#allocation4] sm:$0xff]
    %v67 = vld [vmem:[#allocation4 + $0x8] sm:$0xff]
    %v68 = vld [vmem:[%s2] sm:$0x1]
    %v70 = vperm.slane %v68, 0
    %vm72 = vcmask 130048
    %v74 = vsel %vm72, %v65, 0
    %76 = vmatpush.msra.mxu0 0.0
    %77 = vmatpush.msra.mxu0 0.0
    %78 = vmatpush.msra.mxu0 0.0
    %79 = vmatpush.msra.mxu0 0.0
    %80 = vmatpush.msra.mxu0 0.0
    %81 = vmatpush.msra.mxu0 0.0
    %82 = vmatpush.msra.mxu0 0.0
    %83 = vmatpush.msra.mxu0 0.0
    %84 = vmatpush.msra.mxu0 0.0
    %85 = vmatpush.msra.mxu0 0.0
    %86 = vmatpush.msra.mxu0 0.0
    %87 = vmatpush.msra.mxu0 0.0
    %88 = vmatpush.msra.mxu0 0.0
    %89 = vmatpush.msra.mxu0 0.0
    %90 = vmatpush.msra.mxu0 %v67
    %91 = vmatpush.msra.mxu0 %v66
    %92 = vmatmul.f32.gmra.mxu0 %v74
    %v93 = vpop.f32.mrf.mxu0
    %v94 = vadd.f32 %v70, %v93
    %95 = vdwg.mxu0
    %vm96 = vcmp.gt.f32.partialorder %v94, 0.0
    %v97 = vmin.f32 %v94, 0.0
    %v98 = vmul.f32 %v97, 1.442695
    %v99 = vpow.pop %v98
    %v100 = vsub.f32 %v99, 1.0
    %v101 = vsel %vm96, %v94, %v100
    %v102 = vld [vmem:[#allocation6] sm:$0xff]
    %v103 = vld [vmem:[#allocation6 + $0x8] sm:$0xff]
    %v104 = vld [vmem:[#allocation6 + $0x10] sm:$0xff]
    %v105 = vld [vmem:[#allocation6 + $0x18] sm:$0xff]
    %v106 = vld [vmem:[#allocation6 + $0x20] sm:$0xff]
    %v107 = vld [vmem:[#allocation6 + $0x28] sm:$0xff]
    %v108 = vld [vmem:[#allocation6 + $0x30] sm:$0xff]
    %v109 = vld [vmem:[#allocation6 + $0x38] sm:$0xff]
    %v110 = vld [vmem:[#allocation6 + $0x40] sm:$0xff]
    %v111 = vld [vmem:[#allocation6 + $0x48] sm:$0xff]
    %v112 = vld [vmem:[#allocation6 + $0x50] sm:$0xff]
    %v113 = vld [vmem:[#allocation6 + $0x58] sm:$0xff]
    %v114 = vld [vmem:[#allocation6 + $0x60] sm:$0xff]
    %v115 = vld [vmem:[#allocation6 + $0x68] sm:$0xff]
    %v116 = vld [vmem:[#allocation6 + $0x70] sm:$0xff]
    %v117 = vld [vmem:[#allocation6 + $0x78] sm:$0xff]
    %v118 = vld [vmem:[%s4] sm:$0x1]
    %v120 = vperm.slane %v118, 0
    %122 = vmatpush.msra.mxu0 %v117
    %123 = vmatpush.msra.mxu0 %v116
    %124 = vmatpush.msra.mxu0 %v115
    %125 = vmatpush.msra.mxu0 %v114
    %126 = vmatpush.msra.mxu0 %v113
    %127 = vmatpush.msra.mxu0 %v112
    %128 = vmatpush.msra.mxu0 %v111
    %129 = vmatpush.msra.mxu0 %v110
    %130 = vmatpush.msra.mxu0 %v109
    %131 = vmatpush.msra.mxu0 %v108
    %132 = vmatpush.msra.mxu0 %v107
    %133 = vmatpush.msra.mxu0 %v106
    %134 = vmatpush.msra.mxu0 %v105
    %135 = vmatpush.msra.mxu0 %v104
    %136 = vmatpush.msra.mxu0 %v103
    %137 = vmatpush.msra.mxu0 %v102
    %138 = vmatmul.f32.gmra.mxu0 %v101
    %v139 = vpop.f32.mrf.mxu0
    %v140 = vadd.f32 %v120, %v139
    %141 = vdwg.mxu0
    %142 = vmax.xlane.f32.xlu0 %v140
    %v143 = vpop.xlane.xlu0 %142
    %v144 = vsub.f32 %v140, %v143
    %v145 = vmul.f32 %v144, 1.442695
    %v146 = vpow.pop %v145
    %147 = vadd.xlane.f32.xlu0 %v146
    %v148 = vpop.xlane.xlu0 %147
    %v149 = vlog2.pop %v148
    %v150 = vmul.f32 %v149, 0.6931472
    %v151 = vadd.f32 %v143, %v150
    %v152 = vsub.f32 %v140, %v151
    %vm153 = vcmask 64512
    %154 = vst.msk [vmem:[%s5] sm:$0xff] %vm153, %v152
    // Predicated region
    $region34: #{categorical_network_forward.1} parent=1 // pred_check
      _
    $region35: #{categorical_network_forward.1} parent=1 // pred_check_branch
      %156 = sbr.rel (0) target = $region37
    $region36: #{categorical_network_forward.1} parent=1 // pred_region
      _
    $region37: #{categorical_network_forward.1} parent=1 // pred_fallthru
      _
    // Predicated region
    $region38: #{categorical_network_forward.1} parent=1 // pred_check
      _
    $region39: #{categorical_network_forward.1} parent=1 // pred_check_branch
      %158 = sbr.rel (0) target = $region41
    $region40: #{categorical_network_forward.1} parent=1 // pred_region
      _
    $region41: #{categorical_network_forward.1} parent=1 // pred_fallthru
      _
    %159 = vsyncpa [#allocation3], 1
    %160 = vsyncpa [#allocation5], 1

</llo_original>
